<compile_context>
chip_gen: v6e
topology: v6e:2x2x1
jax: 0.10.0
libtpu: 0.0.40
codegen_flags: <defaults>
</compile_context>

<pallas_src>
import jax
import jax.numpy as jnp
from jax.experimental import pallas as pl
from jax.experimental.pallas import tpu as pltpu


def _round_up(x, m):
    return ((x + m - 1) // m) * m


def house_mlp_kernel(x_ref, w1_ref, b1_ref, w2_ref, b2_ref, o_ref):
    # Layer 1 (MXU): (TILE_B, F) @ (F, 8), f32 accumulation, + bias, ReLU (VPU).
    h = jnp.dot(x_ref[...], w1_ref[...], preferred_element_type=jnp.float32)
    h = jnp.maximum(h + b1_ref[...], 0.0)
    # Layer 2 (VPU mul + XLU lane reduce): (TILE_B, 8) * (1, 8) -> sum over 8,
    # plus the SMEM scalar bias.  Avoids a second MXU push/pop round trip.
    y = jnp.sum(h * w2_ref[...], axis=-1, keepdims=True) + b2_ref[0]
    o_ref[...] = y.astype(o_ref.dtype)


def house_model_forward(x, w1, b1, w2, b2, *, tile_b=512):
    """x: (B, F) f32; w1: (F, 8); b1: (1, 8); w2: (1, 8); b2: (1,)."""
    B, F = x.shape

    # Batch tile: multiple of 8 (sublane), capped at tile_b.  Pad B up so the
    # tile divides it evenly; padded rows are sliced off at the end.
    tb = min(int(tile_b), _round_up(B, 8))
    b_pad = _round_up(B, tb)
    if b_pad != B:
        x = jnp.pad(x, ((0, b_pad - B), (0, 0)))
    nb = b_pad // tb

    flops = 2 * b_pad * F * 8 + 3 * b_pad * 8
    bytes_accessed = 4 * (b_pad * F + F * 8 + 8 + 8 + 1 + b_pad)

    out = pl.pallas_call(
        house_mlp_kernel,
        out_shape=jax.ShapeDtypeStruct((b_pad, 1), x.dtype),
        grid=(nb,),
        in_specs=[
            pl.BlockSpec((tb, F), lambda i: (i, 0)),             # x: batch-tiled
            pl.BlockSpec((F, 8), lambda i: (0, 0)),              # w1: VMEM-resident
            pl.BlockSpec((1, 8), lambda i: (0, 0)),              # b1: VMEM-resident
            pl.BlockSpec((1, 8), lambda i: (0, 0)),              # w2: VMEM-resident
            pl.BlockSpec(memory_space=pltpu.MemorySpace.SMEM),   # b2: SMEM scalar
        ],
        out_specs=pl.BlockSpec((tb, 1), lambda i: (i, 0)),
        compiler_params=pltpu.CompilerParams(
            dimension_semantics=("parallel",),
        ),
        cost_estimate=pl.CostEstimate(
            flops=flops, transcendentals=0, bytes_accessed=bytes_accessed
        ),
    )(x, w1, b1, w2, b2)
    return out[:B]


def init_params(key, n_features):
    """Deterministic init mimicking nn.Linear's U(-1/sqrt(fan_in), 1/sqrt(fan_in))."""
    k1, k2, k3, k4 = jax.random.split(key, 4)
    bound1 = 1.0 / jnp.sqrt(jnp.float32(n_features))
    bound2 = 1.0 / jnp.sqrt(jnp.float32(8))
    w1 = jax.random.uniform(k1, (n_features, 8), jnp.float32, -bound1, bound1)
    b1 = jax.random.uniform(k2, (1, 8), jnp.float32, -bound1, bound1)
    w2 = jax.random.uniform(k3, (1, 8), jnp.float32, -bound2, bound2)  # PyTorch (out, in)
    b2 = jax.random.uniform(k4, (1,), jnp.float32, -bound2, bound2)
    return w1, b1, w2, b2


def _reference(x, w1, b1, w2, b2):
    h = jnp.maximum(x @ w1 + b1, 0.0)
    return h @ w2.T + b2


if __name__ == "__main__":
    key = jax.random.PRNGKey(0)
    kx, kx2, kp = jax.random.split(key, 3)

    n_features = 13  # Boston housing has 13 features
    w1, b1, w2, b2 = init_params(kp, n_features)

    # Small batch (single tile).
    batch = 8
    x = jax.random.normal(kx, (batch, n_features), jnp.float32)
    out = jax.block_until_ready(house_model_forward(x, w1, b1, w2, b2))
    ref = _reference(x, w1, b1, w2, b2)
    assert out.shape == (batch, 1), out.shape
    assert jnp.allclose(out, ref, atol=1e-5, rtol=1e-5), "mismatch vs reference (B=8)"

    # Larger, non-multiple batch: exercises batch tiling + padding + slice.
    batch2 = 1000
    x2 = jax.random.normal(kx2, (batch2, n_features), jnp.float32)
    out2 = jax.block_until_ready(house_model_forward(x2, w1, b1, w2, b2))
    ref2 = _reference(x2, w1, b1, w2, b2)
    assert out2.shape == (batch2, 1), out2.shape
    assert jnp.allclose(out2, ref2, atol=1e-4, rtol=1e-5), "mismatch vs reference (B=1000)"

    print("KERNEL_OK")
</pallas_src>

<mosaic_0001>
module attributes {stable_mosaic.version = 11 : i64} {
  func.func @house_mlp_kernel(%arg0: i32, %arg1: memref<8x13xf32, #tpu.memory_space<vmem>>, %arg2: memref<13x8xf32, #tpu.memory_space<vmem>>, %arg3: memref<1x8xf32, #tpu.memory_space<vmem>>, %arg4: memref<1x8xf32, #tpu.memory_space<vmem>>, %arg5: memref<1xf32, #tpu.memory_space<smem>>, %arg6: memref<8x1xf32, #tpu.memory_space<vmem>>) attributes {dimension_semantics = [#tpu.dimension_semantics<parallel>], iteration_bounds = array<i64: 1>, scalar_prefetch = 0 : i64, scratch_operands = 0 : i64, tpu.core_type = #tpu.core_type<tc>, window_params = [{transform_indices = @transform_0, window_bounds = array<i64: 8, 13>}, {pipeline_mode = #tpu.pipeline_mode<synchronous>, transform_indices = @transform_1, window_bounds = array<i64: 13, 8>}, {pipeline_mode = #tpu.pipeline_mode<synchronous>, transform_indices = @transform_2, window_bounds = array<i64: 1, 8>}, {pipeline_mode = #tpu.pipeline_mode<synchronous>, transform_indices = @transform_3, window_bounds = array<i64: 1, 8>}, {transform_indices = @transform_4, window_bounds = array<i64: 1>}, {transform_indices = @transform_5, window_bounds = array<i64: 8, 1>}]} {
    %c0 = arith.constant 0 : index
    %c0_0 = arith.constant 0 : index
    %0 = vector.load %arg1[%c0, %c0_0] : memref<8x13xf32, #tpu.memory_space<vmem>>, vector<8x13xf32>
    %c0_1 = arith.constant 0 : index
    %c0_2 = arith.constant 0 : index
    %1 = vector.load %arg2[%c0_1, %c0_2] : memref<13x8xf32, #tpu.memory_space<vmem>>, vector<13x8xf32>
    %cst = arith.constant dense<0.000000e+00> : vector<8x8xf32>
    %2 = tpu.matmul %0, %1, %cst {dimension_numbers = #tpu.dot_dimension_numbers<[1], [0], [0], [1], [0, 0, 1, 1], [], []>} : vector<8x13xf32>, vector<13x8xf32>, vector<8x8xf32> -> vector<8x8xf32>
    %c0_3 = arith.constant 0 : index
    %c0_4 = arith.constant 0 : index
    %3 = vector.load %arg3[%c0_3, %c0_4] : memref<1x8xf32, #tpu.memory_space<vmem>>, vector<1x8xf32>
    %4 = vector.broadcast %3 : vector<1x8xf32> to vector<8x8xf32>
    %5 = arith.addf %2, %4 : vector<8x8xf32>
    %cst_5 = arith.constant 0.000000e+00 : f32
    %6 = vector.broadcast %cst_5 : f32 to vector<8x8xf32>
    %7 = arith.maximumf %5, %6 : vector<8x8xf32>
    %c0_6 = arith.constant 0 : index
    %c0_7 = arith.constant 0 : index
    %8 = vector.load %arg4[%c0_6, %c0_7] : memref<1x8xf32, #tpu.memory_space<vmem>>, vector<1x8xf32>
    %9 = vector.broadcast %8 : vector<1x8xf32> to vector<8x8xf32>
    %10 = arith.mulf %7, %9 : vector<8x8xf32>
    %cst_8 = arith.constant dense<0.000000e+00> : vector<8xf32>
    %11 = vector.multi_reduction <add>, %10, %cst_8 [1] : vector<8x8xf32> to vector<8xf32>
    %12 = vector.shape_cast %11 : vector<8xf32> to vector<8x1xf32>
    %c0_9 = arith.constant 0 : index
    %13 = memref.load %arg5[%c0_9] : memref<1xf32, #tpu.memory_space<smem>>
    %14 = vector.broadcast %13 : f32 to vector<8x1xf32>
    %15 = arith.addf %12, %14 : vector<8x1xf32>
    %c0_10 = arith.constant 0 : index
    %c0_11 = arith.constant 0 : index
    %16 = vector.load %arg6[%c0_10, %c0_11] : memref<8x1xf32, #tpu.memory_space<vmem>>, vector<8x1xf32>
    tpu.vector_store %arg6[%c0_10, %c0_11], %15 {strides = array<i32>} : memref<8x1xf32, #tpu.memory_space<vmem>>, vector<8x1xf32>,
    return
  }
  func.func @transform_0(%arg0: i32) -> (i32, i32) {
    %c0_i32 = arith.constant 0 : i32
    %c0_i32_0 = arith.constant 0 : i32
    return %arg0, %c0_i32 : i32, i32
  }
  func.func @transform_1(%arg0: i32) -> (i32, i32) {
    %c0_i32 = arith.constant 0 : i32
    %c0_i32_0 = arith.constant 0 : i32
    %c0_i32_1 = arith.constant 0 : i32
    return %c0_i32, %c0_i32_0 : i32, i32
  }
  func.func @transform_2(%arg0: i32) -> (i32, i32) {
    %c0_i32 = arith.constant 0 : i32
    %c0_i32_0 = arith.constant 0 : i32
    %c0_i32_1 = arith.constant 0 : i32
    return %c0_i32, %c0_i32_0 : i32, i32
  }
  func.func @transform_3(%arg0: i32) -> (i32, i32) {
    %c0_i32 = arith.constant 0 : i32
    %c0_i32_0 = arith.constant 0 : i32
    %c0_i32_1 = arith.constant 0 : i32
    return %c0_i32, %c0_i32_0 : i32, i32
  }
  func.func @transform_4(%arg0: i32) -> i32 {
    %c0_i32 = arith.constant 0 : i32
    %c0_i32_0 = arith.constant 0 : i32
    return %c0_i32 : i32
  }
  func.func @transform_5(%arg0: i32) -> (i32, i32) {
    %c0_i32 = arith.constant 0 : i32
    %c0_i32_0 = arith.constant 0 : i32
    return %arg0, %c0_i32 : i32, i32
  }
}

</mosaic_0001>

<llo_original>
// kernel: tpu_custom_call.1
$region0: #{tpu_custom_call.1}
  #allocation0 [shape = 'u32[]', space=smem, size = 0x4, offset = 0x4, fixed_abs, tag = 'smem constant byte address 0x4 - core index']
  #allocation1 [shape = 'u32[144,128]{1,0:T(1,128)}', space=vmem, size = 0x12000, scoped, tag = 'internal scratch']
  #allocation2 [shape = 'f32[1]{0:T(128)S(6)}', space=smem, size = 0x200, scoped, tag = 'scoped memory for tpu_custom_call.1']
  %s0 = inlined_call_operand.vmem [shape: f32[8,13], index: 0, kind: input, shape index: {}]
  %s1 = inlined_call_operand.vmem [shape: f32[13,8], index: 1, kind: input, shape index: {}]
  %s2 = inlined_call_operand.vmem [shape: f32[1,8], index: 2, kind: input, shape index: {}]
  %s3 = inlined_call_operand.vmem [shape: f32[1,8], index: 3, kind: input, shape index: {}]
  %s4 = inlined_call_operand.<no memory space> [shape: f32[1], index: 4, kind: input, shape index: {}]
  %s5 = inlined_call_operand.vmem [shape: f32[8,1], index: 5, kind: output, shape index: {}]
  %s6 = sld [smem:[#allocation0]]
  $region30: #{tpu_custom_call.1} parent=0
    _
  %s8 = ssub.s32 1, %s6
  %s9 = scalar_select 0, %s8, %s6
  %10 = sst [smem:[#allocation2]] %s4
  // Predicated region
  $region2: #{tpu_custom_call.1} parent=0 // pred_check
    _
  $region3: #{tpu_custom_call.1} parent=0 // pred_check_branch
    %12 = sbr.rel (0) target = $region5
  $region4: #{tpu_custom_call.1} parent=0 // pred_region
    _
  $region5: #{tpu_custom_call.1} parent=0 // pred_fallthru
    _
  // Predicated region
  $region6: #{tpu_custom_call.1} parent=0 // pred_check
    _
  $region7: #{tpu_custom_call.1} parent=0 // pred_check_branch
    %14 = sbr.rel (0) target = $region9
  $region8: #{tpu_custom_call.1} parent=0 // pred_region
    _
  $region9: #{tpu_custom_call.1} parent=0 // pred_fallthru
    _
  // Predicated region
  $region10: #{tpu_custom_call.1} parent=0 // pred_check
    _
  $region11: #{tpu_custom_call.1} parent=0 // pred_check_branch
    %16 = sbr.rel (0) target = $region13
  $region12: #{tpu_custom_call.1} parent=0 // pred_region
    _
  $region13: #{tpu_custom_call.1} parent=0 // pred_fallthru
    _
  // Predicated region
  $region14: #{tpu_custom_call.1} parent=0 // pred_check
    _
  $region15: #{tpu_custom_call.1} parent=0 // pred_check_branch
    %18 = sbr.rel (0) target = $region17
  $region16: #{tpu_custom_call.1} parent=0 // pred_region
    _
  $region17: #{tpu_custom_call.1} parent=0 // pred_fallthru
    _
  // Predicated region
  $region18: #{tpu_custom_call.1} parent=0 // pred_check
    _
  $region19: #{tpu_custom_call.1} parent=0 // pred_check_branch
    %20 = sbr.rel (0) target = $region21
  $region20: #{tpu_custom_call.1} parent=0 // pred_region
    _
  $region21: #{tpu_custom_call.1} parent=0 // pred_fallthru
    _
  %v21 = vld [vmem:[%s0] sm:$0xff]
  %v22 = vld [vmem:[%s1] sm:$0xff]
  %v23 = vld [vmem:[%s1 + $0x8] sm:$0x1f]
  %v24 = vld [vmem:[%s2] sm:$0x1]
  %v26 = vlaneseq
  %v27 = vshrl.u32 %v26, 7
  %v28 = vsub.s32 0, %v27
  %v29 = vrot.slane %v24, %v28
  %vm31 = vcmask 105472
  %v33 = vsel %vm31, %v21, 0
  %vm35 = vcmask 1044480
  %v37 = vsel %vm35, %v23, 0
  %39 = vmatprep.subr.mxu0 0.0
  %40 = vmatpush1.msra.mxu0 0.0
  %41 = vmatprep.subr.mxu0 0.0
  %42 = vmatpush1.msra.mxu0 0.0
  %43 = vmatprep.subr.mxu0 0.0
  %44 = vmatpush1.msra.mxu0 0.0
  %45 = vmatprep.subr.mxu0 0.0
  %46 = vmatpush1.msra.mxu0 0.0
  %47 = vmatprep.subr.mxu0 0.0
  %48 = vmatpush1.msra.mxu0 0.0
  %49 = vmatprep.subr.mxu0 0.0
  %50 = vmatpush1.msra.mxu0 0.0
  %51 = vmatprep.subr.mxu0 0.0
  %52 = vmatpush1.msra.mxu0 0.0
  %53 = vmatprep.subr.mxu0 0.0
  %54 = vmatpush1.msra.mxu0 0.0
  %55 = vmatprep.subr.mxu0 0.0
  %56 = vmatpush1.msra.mxu0 0.0
  %57 = vmatprep.subr.mxu0 0.0
  %58 = vmatpush1.msra.mxu0 0.0
  %59 = vmatprep.subr.mxu0 0.0
  %60 = vmatpush1.msra.mxu0 0.0
  %61 = vmatprep.subr.mxu0 0.0
  %62 = vmatpush1.msra.mxu0 0.0
  %63 = vmatprep.subr.mxu0 0.0
  %64 = vmatpush1.msra.mxu0 0.0
  %65 = vmatprep.subr.mxu0 0.0
  %66 = vmatpush1.msra.mxu0 0.0
  %67 = vmatprep.subr.mxu0 0.0
  %68 = vmatpush1.msra.mxu0 %v37
  %69 = vmatprep.subr.mxu0 0.0
  %70 = vmatpush1.msra.mxu0 %v22
  %71 = vmatprep.subr.mxu0 0.0
  %72 = vmatpush2.msra.mxu0 0.0
  %73 = vmatprep.subr.mxu0 0.0
  %74 = vmatpush2.msra.mxu0 0.0
  %75 = vmatprep.subr.mxu0 0.0
  %76 = vmatpush2.msra.mxu0 0.0
  %77 = vmatprep.subr.mxu0 0.0
  %78 = vmatpush2.msra.mxu0 0.0
  %79 = vmatprep.subr.mxu0 0.0
  %80 = vmatpush2.msra.mxu0 0.0
  %81 = vmatprep.subr.mxu0 0.0
  %82 = vmatpush2.msra.mxu0 0.0
  %83 = vmatprep.subr.mxu0 0.0
  %84 = vmatpush2.msra.mxu0 0.0
  %85 = vmatprep.subr.mxu0 0.0
  %86 = vmatpush2.msra.mxu0 0.0
  %87 = vmatprep.subr.mxu0 0.0
  %88 = vmatpush2.msra.mxu0 0.0
  %89 = vmatprep.subr.mxu0 0.0
  %90 = vmatpush2.msra.mxu0 0.0
  %91 = vmatprep.subr.mxu0 0.0
  %92 = vmatpush2.msra.mxu0 0.0
  %93 = vmatprep.subr.mxu0 0.0
  %94 = vmatpush2.msra.mxu0 0.0
  %95 = vmatprep.subr.mxu0 0.0
  %96 = vmatpush2.msra.mxu0 0.0
  %97 = vmatprep.subr.mxu0 0.0
  %98 = vmatpush2.msra.mxu0 0.0
  %99 = vmatprep.subr.mxu0 0.0
  %100 = vmatpush2.msra.mxu0 0.0
  %101 = vmatprep.subr.mxu0 0.0
  %102 = vmatpush2.msra.mxu0 0.0
  %103 = vmatprep.mubr.f32.mxu0 0.0
  %104 = vmatmul.mubr.f32.gmra.mxu0 %v33
  %v105 = vpop.f32.mrf.mxu0
  %v106 = vadd.f32 %v29, %v105
  %v107 = vpop.f32.mrf.mxu0
  %108 = vdwg.mxu0
  %v109 = vmax.f32 %v106, 0.0
  %v110 = vld [vmem:[%s3] sm:$0x1]
  %v112 = vlaneseq
  %v113 = vshrl.u32 %v112, 7
  %v114 = vsub.s32 0, %v113
  %v115 = vrot.slane %v110, %v114
  %v117 = vmul.f32 %v109, %v115
  %vm118 = vcmask 64512
  %v119 = vsel %vm118, %v117, 0.0
  %120 = vadd.xlane.f32.xlu0 %v119
  %v121 = vpop.xlane.xlu0 %120
  %s122 = sld [smem:[#allocation2]]
  %v123 = vstv %s122
  %v124 = vadd.f32 %v121, %v123
  %vm125 = vcmask 7168
  %126 = vst.msk [vmem:[%s5] sm:$0xff] %vm125, %v124
  // Predicated region
  $region22: #{tpu_custom_call.1} parent=0 // pred_check
    _
  $region23: #{tpu_custom_call.1} parent=0 // pred_check_branch
    %128 = sbr.rel (0) target = $region25
  $region24: #{tpu_custom_call.1} parent=0 // pred_region
    _
  $region25: #{tpu_custom_call.1} parent=0 // pred_fallthru
    _
  // Predicated region
  $region26: #{tpu_custom_call.1} parent=0 // pred_check
    _
  $region27: #{tpu_custom_call.1} parent=0 // pred_check_branch
    %130 = sbr.rel (0) target = $region29
  $region28: #{tpu_custom_call.1} parent=0 // pred_region
    _
  $region29: #{tpu_custom_call.1} parent=0 // pred_fallthru
    _

</llo_original>
